<compile_context>
chip_gen: v5e
topology: v5e:2x2
jax: 0.10.0
libtpu: 0.0.40
codegen_flags: <defaults>
</compile_context>

<pallas_src>
import numpy as np
import jax
import jax.numpy as jnp
from jax.experimental import pallas as pl
from jax.experimental.pallas import tpu as pltpu

_LANES = 128      # vreg lane width: last dim multiple of 128 -> unmasked vst
_SUBLANES = 8     # sublane granularity for the second-to-last dim


def _copy_kernel(x_ref, o_ref):
    # Pure pass-through: VMEM load + VMEM store of the current tile.
    o_ref[...] = x_ref[...]


def _device_kind() -> str:
    try:
        return jax.devices()[0].device_kind.lower()
    except Exception:
        return ""


def _tile_config(dtype_bytes):
    """Per-generation tile rows, optional vmem limit, and v7x megacore split."""
    kind = _device_kind()
    if "v7" in kind:
        # 8 MiB tiles; in+out double-buffered = 32 MiB, needs a raised scoped
        # VMEM limit but is well inside v7x's 64 MiB physical VMEM.
        tile_bytes, vmem_limit, split = 8 << 20, 48 << 20, True
    elif "v6" in kind:
        # 4 MiB tiles; 16 MiB live, under the 32 MiB default scoped VMEM.
        tile_bytes, vmem_limit, split = 4 << 20, None, False
    else:
        # v5e (16 MiB scoped default) or unknown: stay conservative at 2 MiB.
        tile_bytes, vmem_limit, split = 2 << 20, None, False
    tile_rows = (tile_bytes // (_LANES * dtype_bytes)) // _SUBLANES * _SUBLANES
    tile_rows = max(_SUBLANES, tile_rows)
    return tile_rows, vmem_limit, split


def _identity_copy_pallas(x):
    """Reference Pallas path: lane-dense, tiled, double-buffered HBM copy."""
    orig_shape = x.shape
    total = x.size
    dtype_bytes = jnp.dtype(x.dtype).itemsize
    bytes_accessed = 2 * total * dtype_bytes  # read + write

    if total % _LANES == 0:
        rows = total // _LANES
        x2d = x.reshape(rows, _LANES)
        tile_rows, vmem_limit, split = _tile_config(dtype_bytes)

        if rows % _SUBLANES == 0:
            block_rows = min(tile_rows, rows)
            if split and rows > _SUBLANES and pl.cdiv(rows, block_rows) < 2:
                # v7x has 2 TensorCores: force >=2 tiles so both contribute.
                half = pl.cdiv(rows, 2)
                block_rows = max(
                    _SUBLANES,
                    ((half + _SUBLANES - 1) // _SUBLANES) * _SUBLANES,
                )
        else:
            # Second-to-last dim need not be a multiple of 8 if it equals the
            # full extent -> single full-extent block for small odd row counts.
            block_rows = rows

        grid = (pl.cdiv(rows, block_rows),)
        compiler_kwargs = dict(dimension_semantics=("parallel",))
        if vmem_limit is not None:
            compiler_kwargs["vmem_limit_bytes"] = vmem_limit

        y2d = pl.pallas_call(
            _copy_kernel,
            out_shape=jax.ShapeDtypeStruct((rows, _LANES), x.dtype),
            grid=grid,
            in_specs=[pl.BlockSpec((block_rows, _LANES), lambda i: (i, 0))],
            out_specs=pl.BlockSpec((block_rows, _LANES), lambda i: (i, 0)),
            cost_estimate=pl.CostEstimate(
                flops=0, transcendentals=0, bytes_accessed=bytes_accessed),
            compiler_params=pltpu.CompilerParams(**compiler_kwargs),
        )(x2d)
        return y2d.reshape(orig_shape)

    # Truly odd element count: 1-D full-extent single block (last dim equals
    # the full array extent, so the (8,128) divisibility rule does not apply).
    x1d = x.reshape(total)
    y1d = pl.pallas_call(
        _copy_kernel,
        out_shape=jax.ShapeDtypeStruct((total,), x.dtype),
        in_specs=[pl.BlockSpec((total,), lambda: (0,))],
        out_specs=pl.BlockSpec((total,), lambda: (0,)),
        cost_estimate=pl.CostEstimate(
            flops=0, transcendentals=0, bytes_accessed=bytes_accessed),
    )(x1d)
    return y1d.reshape(orig_shape)


def resnet_forward(x, *, use_pallas_copy=False):
    """Pallas implementation of resnet.forward(x) -> x.

    The identity is optimally a no-op, so by default we return `x` unchanged
    (zero HBM traffic).  Set use_pallas_copy=True to run the tuned Pallas
    copy kernel (reference / benchmarking path).
    """
    if not use_pallas_copy:
        return x
    return _identity_copy_pallas(x)


if __name__ == "__main__":
    key = jax.random.PRNGKey(0)
    # Small NCHW input consistent with a conv-net style module: (N=2, C=4, H=16, W=16)
    x = jax.random.normal(key, (2, 4, 16, 16), dtype=jnp.float32)
    x_host = np.asarray(x)  # host snapshot for verification

    # Optimal path: pure short-circuit (no HBM traffic at all).
    y_fast = resnet_forward(x)
    jax.block_until_ready(y_fast)
    assert y_fast.shape == x_host.shape and y_fast.dtype == x_host.dtype
    assert np.array_equal(np.asarray(y_fast), x_host)

    # Reference Pallas path: run the kernel once and verify bit-exactness.
    y_kernel = resnet_forward(x, use_pallas_copy=True)
    jax.block_until_ready(y_kernel)
    assert y_kernel.shape == x_host.shape and y_kernel.dtype == x_host.dtype
    assert np.array_equal(np.asarray(y_kernel), x_host)

    print("KERNEL_OK")
</pallas_src>

<mosaic_0001>
module attributes {stable_mosaic.version = 11 : i64} {
  func.func @_copy_kernel(%arg0: i32, %arg1: memref<16x128xf32, #tpu.memory_space<vmem>>, %arg2: memref<16x128xf32, #tpu.memory_space<vmem>>) attributes {dimension_semantics = [#tpu.dimension_semantics<parallel>], iteration_bounds = array<i64: 1>, scalar_prefetch = 0 : i64, scratch_operands = 0 : i64, tpu.core_type = #tpu.core_type<tc>, window_params = [{transform_indices = @transform_0, window_bounds = array<i64: 16, 128>}, {transform_indices = @transform_1, window_bounds = array<i64: 16, 128>}]} {
    %c0 = arith.constant 0 : index
    %c0_0 = arith.constant 0 : index
    %0 = vector.load %arg1[%c0, %c0_0] : memref<16x128xf32, #tpu.memory_space<vmem>>, vector<16x128xf32>
    %c0_1 = arith.constant 0 : index
    %c0_2 = arith.constant 0 : index
    %1 = vector.load %arg2[%c0_1, %c0_2] : memref<16x128xf32, #tpu.memory_space<vmem>>, vector<16x128xf32>
    tpu.vector_store %arg2[%c0_1, %c0_2], %0 {strides = array<i32>} : memref<16x128xf32, #tpu.memory_space<vmem>>, vector<16x128xf32>,
    return
  }
  func.func @transform_0(%arg0: i32) -> (i32, i32) {
    %c0_i32 = arith.constant 0 : i32
    %c0_i32_0 = arith.constant 0 : i32
    return %arg0, %c0_i32 : i32, i32
  }
  func.func @transform_1(%arg0: i32) -> (i32, i32) {
    %c0_i32 = arith.constant 0 : i32
    %c0_i32_0 = arith.constant 0 : i32
    return %arg0, %c0_i32 : i32, i32
  }
}

</mosaic_0001>

<llo_original>
// kernel: tpu_custom_call.1
$region0: #{tpu_custom_call.1}
  #allocation0 [shape = 'u32[]', space=smem, size = 0x4, offset = 0x4, fixed_abs, tag = 'smem constant byte address 0x4 - core index']
  #allocation1 [shape = 'u32[72,128]{1,0:T(1,128)}', space=vmem, size = 0x9000, scoped, tag = 'internal scratch']
  %s0 = inlined_call_operand.hbm [shape: f32[16,128], index: 0, kind: input, shape index: {}]
  %s1 = inlined_call_operand.hbm [shape: f32[16,128], index: 1, kind: output, shape index: {}]
  %s2 = sld [smem:[#allocation0]]
  $region18: #{tpu_custom_call.1} parent=0
    _
  %s4 = ssub.s32 1, %s2
  %s5 = scalar_select 0, %s4, %s2
  $region1: #{tpu_custom_call.1} parent=0
    #allocation2 [shape = 'u8[8192]{0}', space=vmem, size = 0x2000, scoped, tag = 'input window, operand 0, single buffered']
    #allocation3 [shape = 's32[1]{0}', space=sflag, size = 0x4, scoped, tag = 'scoped memory for tpu_custom_call.1']
    #allocation4 [shape = 's32[1]{0}', space=sflag, size = 0x4, scoped, tag = 'scoped memory for tpu_custom_call.1']
    #allocation5 [shape = 'u8[8192]{0}', space=vmem, size = 0x2000, scoped, tag = 'output window, operand 0, single buffered']
    %6 = vsyncpa [#allocation3], 0
    %7 = vsyncpa [#allocation4], 0
    // Predicated region
    $region2: #{tpu_custom_call.1} parent=1 // pred_check
      _
    $region3: #{tpu_custom_call.1} parent=1 // pred_check_branch
      %9 = sbr.rel (0) target = $region5
    $region4: #{tpu_custom_call.1} parent=1 // pred_region
      %11 = vsyncadd [#allocation3], 0
      %s12 = sshll.u32 %s0, 4
      %s13 = int_to_ptr.hbm [resolvable:$true] %s12
      %s14 = sshll.u32 [#allocation2], 4
      %s15 = int_to_ptr.vmem [resolvable:$true] %s14
      %20 = dma.hbm_to_vmem [thread:$0]  %s13, 256, %s15, [#allocation3], 128, 128, 8
    $region5: #{tpu_custom_call.1} parent=1 // pred_fallthru
      _
    // Predicated region
    $region6: #{tpu_custom_call.1} parent=1 // pred_check
      _
    $region7: #{tpu_custom_call.1} parent=1 // pred_check_branch
      %22 = sbr.rel (0) target = $region9
    $region8: #{tpu_custom_call.1} parent=1 // pred_region
      %24 = dma.done [#allocation3], 256
    $region9: #{tpu_custom_call.1} parent=1 // pred_fallthru
      _
    %v25 = vld [vmem:[#allocation2] sm:$0xff]
    %v26 = vld [vmem:[#allocation2 + $0x8] sm:$0xff]
    %27 = vst [vmem:[#allocation5] sm:$0xff] %v25
    %28 = vst [vmem:[#allocation5 + $0x8] sm:$0xff] %v26
    // Predicated region
    $region10: #{tpu_custom_call.1} parent=1 // pred_check
      _
    $region11: #{tpu_custom_call.1} parent=1 // pred_check_branch
      %30 = sbr.rel (0) target = $region13
    $region12: #{tpu_custom_call.1} parent=1 // pred_region
      %32 = vsyncadd [#allocation4], 0
      %s33 = sshll.u32 [#allocation5], 4
      %s34 = int_to_ptr.vmem [resolvable:$true] %s33
      %s35 = sshll.u32 %s1, 4
      %s36 = int_to_ptr.hbm [resolvable:$true] %s35
      %41 = dma.vmem_to_hbm [thread:$0]  %s34, 256, %s36, [#allocation4], 128, 128, 8
    $region13: #{tpu_custom_call.1} parent=1 // pred_fallthru
      _
    // Predicated region
    $region14: #{tpu_custom_call.1} parent=1 // pred_check
      _
    $region15: #{tpu_custom_call.1} parent=1 // pred_check_branch
      %43 = sbr.rel (0) target = $region17
    $region16: #{tpu_custom_call.1} parent=1 // pred_region
      %45 = dma.done [#allocation4], 256
    $region17: #{tpu_custom_call.1} parent=1 // pred_fallthru
      _
    %46 = vsyncpa [#allocation3], 1
    %47 = vsyncpa [#allocation4], 1

</llo_original>
